<compile_context>
chip_gen: v7x
topology: tpu7x:2x2x1
jax: 0.10.0
libtpu: 0.0.40
codegen_flags: <defaults>
</compile_context>

<pallas_src>
import functools
import math

import jax
import jax.numpy as jnp
from jax import lax
from jax.experimental import pallas as pl
from jax.experimental.pallas import tpu as pltpu


def _mhsa_body(x_ref, wqkv_ref, wo_ref, mask_ref, o_ref, *, num_heads, latent_dim):
    H, D = num_heads, latent_dim
    HD = H * D

    x = x_ref[0]              # (N, E)  native dtype
    wqkv = wqkv_ref[...]      # (E, 3*H*D)
    wo = wo_ref[...]          # (H*D, E)

    # Fused q/k/v projection: one wide matmul, f32 accumulation on the MXU.
    qkv = jnp.dot(x, wqkv, preferred_element_type=jnp.float32)   # (N, 3*H*D) f32
    q = qkv[:, 0:HD]
    k = qkv[:, HD:2 * HD]
    v = qkv[:, 2 * HD:3 * HD]

    scale = jnp.float32(1.0 / math.sqrt(D))
    if mask_ref is not None:
        m = mask_ref[0].astype(jnp.float32)        # (N, N)
        neg = jnp.float32(-100000000.0) * (jnp.float32(1.0) - m)

    head_outs = []
    for h in range(H):         # H is a small compile-time constant -> unrolled
        qh = q[:, h * D:(h + 1) * D]
        kh = k[:, h * D:(h + 1) * D]
        vh = v[:, h * D:(h + 1) * D]

        # score = qh @ kh^T without an explicit transpose (contract last axes).
        score = lax.dot_general(qh, kh, (((1,), (1,)), ((), ())),
                                preferred_element_type=jnp.float32) * scale
        if mask_ref is not None:
            # Exactly the reference formula: score*mask + (-1e8)*(1-mask).
            score = score * m + neg

        # Softmax over the key axis, in f32.
        smax = jnp.max(score, axis=-1, keepdims=True)
        e = jnp.exp(score - smax)
        denom = jnp.sum(e, axis=-1, keepdims=True)
        p = e * pl.reciprocal(denom, approx=True)

        head_outs.append(jnp.dot(p, vh, preferred_element_type=jnp.float32))  # (N, D)

    # Single wide output projection for all heads.
    out_all = jnp.concatenate(head_outs, axis=-1)                 # (N, H*D)
    o_ref[0] = jnp.dot(out_all, wo,
                       preferred_element_type=jnp.float32).astype(o_ref.dtype)


def _mhsa_kernel_masked(x_ref, wqkv_ref, wo_ref, mask_ref, o_ref, *,
                        num_heads, latent_dim):
    _mhsa_body(x_ref, wqkv_ref, wo_ref, mask_ref, o_ref,
               num_heads=num_heads, latent_dim=latent_dim)


def _mhsa_kernel_nomask(x_ref, wqkv_ref, wo_ref, o_ref, *,
                        num_heads, latent_dim):
    _mhsa_body(x_ref, wqkv_ref, wo_ref, None, o_ref,
               num_heads=num_heads, latent_dim=latent_dim)


def multi_head_self_attention(x, w_q, w_k, w_v, w_o, mask=None):
    """Pallas implementation of MultiHeadSelfAttention.forward (dropout=None)."""
    # TODO(synk): dropout path not implemented (module default dropout=None -> Identity)
    B, N, E = x.shape
    H, E2, D = w_q.shape
    assert E == E2

    # (H, E, D) -> (E, H*D), heads concatenated head-major along the lane axis.
    def _flat(w):
        return jnp.transpose(w, (1, 0, 2)).reshape(E, H * D)

    w_qkv = jnp.concatenate([_flat(w_q), _flat(w_k), _flat(w_v)], axis=-1)  # (E, 3*H*D)
    w_o_flat = w_o.reshape(H * D, E)                                        # (H*D, E)

    in_specs = [
        pl.BlockSpec((1, N, E), lambda b: (b, 0, 0)),          # x
        pl.BlockSpec((E, 3 * H * D), lambda b: (0, 0)),        # fused qkv weights
        pl.BlockSpec((H * D, E), lambda b: (0, 0)),            # output weights
    ]
    args = [x, w_qkv, w_o_flat]

    if mask is not None:
        in_specs.append(pl.BlockSpec((1, N, N), lambda b: (b, 0, 0)))
        args.append(mask)
        kernel = functools.partial(_mhsa_kernel_masked, num_heads=H, latent_dim=D)
    else:
        kernel = functools.partial(_mhsa_kernel_nomask, num_heads=H, latent_dim=D)

    grid_spec = pltpu.PrefetchScalarGridSpec(
        num_scalar_prefetch=0,
        grid=(B,),
        in_specs=in_specs,
        out_specs=pl.BlockSpec((1, N, E), lambda b: (b, 0, 0)),
    )

    return pl.pallas_call(
        kernel,
        out_shape=jax.ShapeDtypeStruct((B, N, E), x.dtype),
        grid_spec=grid_spec,
        compiler_params=pltpu.CompilerParams(
            dimension_semantics=("parallel",)),
    )(*args)


def _xavier_normal(key, shape):
    # torch.nn.init.xavier_normal_ on a 3D tensor (H, E, D):
    # receptive_field = D, fan_in = E*D, fan_out = H*D
    h, e, d = shape[0], shape[1], shape[2]
    fan_in = e * d
    fan_out = h * d
    std = math.sqrt(2.0 / (fan_in + fan_out))
    return std * jax.random.normal(key, shape, dtype=jnp.float32)


def _reference(x, w_q, w_k, w_v, w_o, mask=None):
    """Pure-JAX reference mirroring the PyTorch module (dropout = Identity)."""
    q = jnp.einsum('blj,njd->bnld', x, w_q)
    k = jnp.einsum('blj,njd->bnld', x, w_k)
    v = jnp.einsum('blj,njd->bnld', x, w_v)
    score = jnp.einsum('bnij,bnkj->bnik', q, k) / math.sqrt(q.shape[-1])
    if mask is not None:
        m = mask[:, None]
        score = score * m + -100000000.0 * (1 - m)
    score = jax.nn.softmax(score, axis=-1)
    out = jnp.einsum('bnij,bnjk->bnik', score, v)
    return jnp.einsum('bnlj,njk->blk', out, w_o)


if __name__ == "__main__":
    # small shapes consistent with the module forward: x [B, N, E]
    B, N, E = 2, 8, 32
    H, D = 4, 16

    key = jax.random.PRNGKey(0)
    kx, kq, kk, kv, ko, km = jax.random.split(key, 6)

    x = jax.random.normal(kx, (B, N, E), dtype=jnp.float32)
    w_q = _xavier_normal(kq, (H, E, D))
    w_k = _xavier_normal(kk, (H, E, D))
    w_v = _xavier_normal(kv, (H, E, D))
    w_o = _xavier_normal(ko, (H, D, E))
    # binary mask [B, N, N]
    mask = (jax.random.uniform(km, (B, N, N)) > 0.2).astype(jnp.float32)

    out = multi_head_self_attention(x, w_q, w_k, w_v, w_o, mask)
    jax.block_until_ready(out)

    ref = _reference(x, w_q, w_k, w_v, w_o, mask)
    assert out.shape == (B, N, E)
    # tolerance relaxed slightly because the softmax uses the EUP approximate
    # reciprocal (pl.reciprocal(approx=True)).
    assert jnp.allclose(out, ref, atol=2e-3, rtol=2e-3), "mismatch vs reference"

    out_nomask = multi_head_self_attention(x, w_q, w_k, w_v, w_o, None)
    jax.block_until_ready(out_nomask)
    ref_nomask = _reference(x, w_q, w_k, w_v, w_o, None)
    assert jnp.allclose(out_nomask, ref_nomask, atol=2e-3, rtol=2e-3)

    print("KERNEL_OK")
</pallas_src>

<mosaic_0001>
module attributes {stable_mosaic.version = 11 : i64} {
  func.func @_mhsa_kernel_masked(%arg0: i32, %arg1: memref<1x8x32xf32, #tpu.memory_space<vmem>>, %arg2: memref<32x192xf32, #tpu.memory_space<vmem>>, %arg3: memref<64x32xf32, #tpu.memory_space<vmem>>, %arg4: memref<1x8x8xf32, #tpu.memory_space<vmem>>, %arg5: memref<1x8x32xf32, #tpu.memory_space<vmem>>) attributes {dimension_semantics = [#tpu.dimension_semantics<parallel>], iteration_bounds = array<i64: 2>, scalar_prefetch = 0 : i64, scratch_operands = 0 : i64, tpu.core_type = #tpu.core_type<tc>, window_params = [{transform_indices = @transform_0, window_bounds = array<i64: 1, 8, 32>}, {pipeline_mode = #tpu.pipeline_mode<synchronous>, transform_indices = @transform_1, window_bounds = array<i64: 32, 192>}, {pipeline_mode = #tpu.pipeline_mode<synchronous>, transform_indices = @transform_2, window_bounds = array<i64: 64, 32>}, {transform_indices = @transform_3, window_bounds = array<i64: 1, 8, 8>}, {transform_indices = @transform_4, window_bounds = array<i64: 1, 8, 32>}]} {
    %c0 = arith.constant 0 : index
    %c0_0 = arith.constant 0 : index
    %c0_1 = arith.constant 0 : index
    %0 = vector.load %arg1[%c0, %c0_0, %c0_1] : memref<1x8x32xf32, #tpu.memory_space<vmem>>, vector<1x8x32xf32>
    %1 = vector.shape_cast %0 : vector<1x8x32xf32> to vector<8x32xf32>
    %c0_2 = arith.constant 0 : index
    %c0_3 = arith.constant 0 : index
    %2 = vector.load %arg2[%c0_2, %c0_3] : memref<32x192xf32, #tpu.memory_space<vmem>>, vector<32x192xf32>
    %c0_4 = arith.constant 0 : index
    %c0_5 = arith.constant 0 : index
    %3 = vector.load %arg3[%c0_4, %c0_5] : memref<64x32xf32, #tpu.memory_space<vmem>>, vector<64x32xf32>
    %cst = arith.constant dense<0.000000e+00> : vector<8x192xf32>
    %4 = tpu.matmul %1, %2, %cst {dimension_numbers = #tpu.dot_dimension_numbers<[1], [0], [0], [1], [0, 0, 1, 1], [], []>} : vector<8x32xf32>, vector<32x192xf32>, vector<8x192xf32> -> vector<8x192xf32>
    %5 = vector.extract_strided_slice %4 {offsets = [0, 0], sizes = [8, 64], strides = [1, 1]} : vector<8x192xf32> to vector<8x64xf32>
    %6 = vector.extract_strided_slice %4 {offsets = [0, 64], sizes = [8, 64], strides = [1, 1]} : vector<8x192xf32> to vector<8x64xf32>
    %7 = vector.extract_strided_slice %4 {offsets = [0, 128], sizes = [8, 64], strides = [1, 1]} : vector<8x192xf32> to vector<8x64xf32>
    %c0_6 = arith.constant 0 : index
    %c0_7 = arith.constant 0 : index
    %c0_8 = arith.constant 0 : index
    %8 = vector.load %arg4[%c0_6, %c0_7, %c0_8] : memref<1x8x8xf32, #tpu.memory_space<vmem>>, vector<1x8x8xf32>
    %9 = vector.shape_cast %8 : vector<1x8x8xf32> to vector<8x8xf32>
    %cst_9 = arith.constant 1.000000e+00 : f32
    %10 = vector.broadcast %cst_9 : f32 to vector<8x8xf32>
    %11 = arith.subf %10, %9 : vector<8x8xf32>
    %cst_10 = arith.constant -1.000000e+08 : f32
    %12 = vector.broadcast %cst_10 : f32 to vector<8x8xf32>
    %13 = arith.mulf %12, %11 : vector<8x8xf32>
    %14 = vector.extract_strided_slice %5 {offsets = [0, 0], sizes = [8, 16], strides = [1, 1]} : vector<8x64xf32> to vector<8x16xf32>
    %15 = vector.extract_strided_slice %6 {offsets = [0, 0], sizes = [8, 16], strides = [1, 1]} : vector<8x64xf32> to vector<8x16xf32>
    %16 = vector.extract_strided_slice %7 {offsets = [0, 0], sizes = [8, 16], strides = [1, 1]} : vector<8x64xf32> to vector<8x16xf32>
    %cst_11 = arith.constant dense<0.000000e+00> : vector<8x8xf32>
    %17 = tpu.matmul %14, %15, %cst_11 {dimension_numbers = #tpu.dot_dimension_numbers<[1], [1], [0], [0], [0, 0, 1, 0], [], []>} : vector<8x16xf32>, vector<8x16xf32>, vector<8x8xf32> -> vector<8x8xf32>
    %cst_12 = arith.constant 2.500000e-01 : f32
    %18 = vector.broadcast %cst_12 : f32 to vector<8x8xf32>
    %19 = arith.mulf %17, %18 : vector<8x8xf32>
    %20 = arith.mulf %19, %9 : vector<8x8xf32>
    %21 = arith.addf %20, %13 : vector<8x8xf32>
    %cst_13 = arith.constant dense<0xFF800000> : vector<8xf32>
    %22 = vector.multi_reduction <maximumf>, %21, %cst_13 [1] : vector<8x8xf32> to vector<8xf32>
    %23 = vector.shape_cast %22 : vector<8xf32> to vector<8x1xf32>
    %24 = vector.broadcast %23 : vector<8x1xf32> to vector<8x8xf32>
    %25 = arith.subf %21, %24 : vector<8x8xf32>
    %26 = math.exp %25 : vector<8x8xf32>
    %cst_14 = arith.constant dense<0.000000e+00> : vector<8xf32>
    %27 = vector.multi_reduction <add>, %26, %cst_14 [1] : vector<8x8xf32> to vector<8xf32>
    %28 = vector.shape_cast %27 : vector<8xf32> to vector<8x1xf32>
    %29 = tpu.reciprocal %28 {approx = true} : vector<8x1xf32> -> vector<8x1xf32>
    %30 = vector.broadcast %29 : vector<8x1xf32> to vector<8x8xf32>
    %31 = arith.mulf %26, %30 : vector<8x8xf32>
    %cst_15 = arith.constant dense<0.000000e+00> : vector<8x16xf32>
    %32 = tpu.matmul %31, %16, %cst_15 {dimension_numbers = #tpu.dot_dimension_numbers<[1], [0], [0], [1], [0, 0, 1, 1], [], []>} : vector<8x8xf32>, vector<8x16xf32>, vector<8x16xf32> -> vector<8x16xf32>
    %33 = vector.extract_strided_slice %5 {offsets = [0, 16], sizes = [8, 16], strides = [1, 1]} : vector<8x64xf32> to vector<8x16xf32>
    %34 = vector.extract_strided_slice %6 {offsets = [0, 16], sizes = [8, 16], strides = [1, 1]} : vector<8x64xf32> to vector<8x16xf32>
    %35 = vector.extract_strided_slice %7 {offsets = [0, 16], sizes = [8, 16], strides = [1, 1]} : vector<8x64xf32> to vector<8x16xf32>
    %cst_16 = arith.constant dense<0.000000e+00> : vector<8x8xf32>
    %36 = tpu.matmul %33, %34, %cst_16 {dimension_numbers = #tpu.dot_dimension_numbers<[1], [1], [0], [0], [0, 0, 1, 0], [], []>} : vector<8x16xf32>, vector<8x16xf32>, vector<8x8xf32> -> vector<8x8xf32>
    %cst_17 = arith.constant 2.500000e-01 : f32
    %37 = vector.broadcast %cst_17 : f32 to vector<8x8xf32>
    %38 = arith.mulf %36, %37 : vector<8x8xf32>
    %39 = arith.mulf %38, %9 : vector<8x8xf32>
    %40 = arith.addf %39, %13 : vector<8x8xf32>
    %cst_18 = arith.constant dense<0xFF800000> : vector<8xf32>
    %41 = vector.multi_reduction <maximumf>, %40, %cst_18 [1] : vector<8x8xf32> to vector<8xf32>
    %42 = vector.shape_cast %41 : vector<8xf32> to vector<8x1xf32>
    %43 = vector.broadcast %42 : vector<8x1xf32> to vector<8x8xf32>
    %44 = arith.subf %40, %43 : vector<8x8xf32>
    %45 = math.exp %44 : vector<8x8xf32>
    %cst_19 = arith.constant dense<0.000000e+00> : vector<8xf32>
    %46 = vector.multi_reduction <add>, %45, %cst_19 [1] : vector<8x8xf32> to vector<8xf32>
    %47 = vector.shape_cast %46 : vector<8xf32> to vector<8x1xf32>
    %48 = tpu.reciprocal %47 {approx = true} : vector<8x1xf32> -> vector<8x1xf32>
    %49 = vector.broadcast %48 : vector<8x1xf32> to vector<8x8xf32>
    %50 = arith.mulf %45, %49 : vector<8x8xf32>
    %cst_20 = arith.constant dense<0.000000e+00> : vector<8x16xf32>
    %51 = tpu.matmul %50, %35, %cst_20 {dimension_numbers = #tpu.dot_dimension_numbers<[1], [0], [0], [1], [0, 0, 1, 1], [], []>} : vector<8x8xf32>, vector<8x16xf32>, vector<8x16xf32> -> vector<8x16xf32>
    %52 = vector.extract_strided_slice %5 {offsets = [0, 32], sizes = [8, 16], strides = [1, 1]} : vector<8x64xf32> to vector<8x16xf32>
    %53 = vector.extract_strided_slice %6 {offsets = [0, 32], sizes = [8, 16], strides = [1, 1]} : vector<8x64xf32> to vector<8x16xf32>
    %54 = vector.extract_strided_slice %7 {offsets = [0, 32], sizes = [8, 16], strides = [1, 1]} : vector<8x64xf32> to vector<8x16xf32>
    %cst_21 = arith.constant dense<0.000000e+00> : vector<8x8xf32>
    %55 = tpu.matmul %52, %53, %cst_21 {dimension_numbers = #tpu.dot_dimension_numbers<[1], [1], [0], [0], [0, 0, 1, 0], [], []>} : vector<8x16xf32>, vector<8x16xf32>, vector<8x8xf32> -> vector<8x8xf32>
    %cst_22 = arith.constant 2.500000e-01 : f32
    %56 = vector.broadcast %cst_22 : f32 to vector<8x8xf32>
    %57 = arith.mulf %55, %56 : vector<8x8xf32>
    %58 = arith.mulf %57, %9 : vector<8x8xf32>
    %59 = arith.addf %58, %13 : vector<8x8xf32>
    %cst_23 = arith.constant dense<0xFF800000> : vector<8xf32>
    %60 = vector.multi_reduction <maximumf>, %59, %cst_23 [1] : vector<8x8xf32> to vector<8xf32>
    %61 = vector.shape_cast %60 : vector<8xf32> to vector<8x1xf32>
    %62 = vector.broadcast %61 : vector<8x1xf32> to vector<8x8xf32>
    %63 = arith.subf %59, %62 : vector<8x8xf32>
    %64 = math.exp %63 : vector<8x8xf32>
    %cst_24 = arith.constant dense<0.000000e+00> : vector<8xf32>
    %65 = vector.multi_reduction <add>, %64, %cst_24 [1] : vector<8x8xf32> to vector<8xf32>
    %66 = vector.shape_cast %65 : vector<8xf32> to vector<8x1xf32>
    %67 = tpu.reciprocal %66 {approx = true} : vector<8x1xf32> -> vector<8x1xf32>
    %68 = vector.broadcast %67 : vector<8x1xf32> to vector<8x8xf32>
    %69 = arith.mulf %64, %68 : vector<8x8xf32>
    %cst_25 = arith.constant dense<0.000000e+00> : vector<8x16xf32>
    %70 = tpu.matmul %69, %54, %cst_25 {dimension_numbers = #tpu.dot_dimension_numbers<[1], [0], [0], [1], [0, 0, 1, 1], [], []>} : vector<8x8xf32>, vector<8x16xf32>, vector<8x16xf32> -> vector<8x16xf32>
    %71 = vector.extract_strided_slice %5 {offsets = [0, 48], sizes = [8, 16], strides = [1, 1]} : vector<8x64xf32> to vector<8x16xf32>
    %72 = vector.extract_strided_slice %6 {offsets = [0, 48], sizes = [8, 16], strides = [1, 1]} : vector<8x64xf32> to vector<8x16xf32>
    %73 = vector.extract_strided_slice %7 {offsets = [0, 48], sizes = [8, 16], strides = [1, 1]} : vector<8x64xf32> to vector<8x16xf32>
    %cst_26 = arith.constant dense<0.000000e+00> : vector<8x8xf32>
    %74 = tpu.matmul %71, %72, %cst_26 {dimension_numbers = #tpu.dot_dimension_numbers<[1], [1], [0], [0], [0, 0, 1, 0], [], []>} : vector<8x16xf32>, vector<8x16xf32>, vector<8x8xf32> -> vector<8x8xf32>
    %cst_27 = arith.constant 2.500000e-01 : f32
    %75 = vector.broadcast %cst_27 : f32 to vector<8x8xf32>
    %76 = arith.mulf %74, %75 : vector<8x8xf32>
    %77 = arith.mulf %76, %9 : vector<8x8xf32>
    %78 = arith.addf %77, %13 : vector<8x8xf32>
    %cst_28 = arith.constant dense<0xFF800000> : vector<8xf32>
    %79 = vector.multi_reduction <maximumf>, %78, %cst_28 [1] : vector<8x8xf32> to vector<8xf32>
    %80 = vector.shape_cast %79 : vector<8xf32> to vector<8x1xf32>
    %81 = vector.broadcast %80 : vector<8x1xf32> to vector<8x8xf32>
    %82 = arith.subf %78, %81 : vector<8x8xf32>
    %83 = math.exp %82 : vector<8x8xf32>
    %cst_29 = arith.constant dense<0.000000e+00> : vector<8xf32>
    %84 = vector.multi_reduction <add>, %83, %cst_29 [1] : vector<8x8xf32> to vector<8xf32>
    %85 = vector.shape_cast %84 : vector<8xf32> to vector<8x1xf32>
    %86 = tpu.reciprocal %85 {approx = true} : vector<8x1xf32> -> vector<8x1xf32>
    %87 = vector.broadcast %86 : vector<8x1xf32> to vector<8x8xf32>
    %88 = arith.mulf %83, %87 : vector<8x8xf32>
    %cst_30 = arith.constant dense<0.000000e+00> : vector<8x16xf32>
    %89 = tpu.matmul %88, %73, %cst_30 {dimension_numbers = #tpu.dot_dimension_numbers<[1], [0], [0], [1], [0, 0, 1, 1], [], []>} : vector<8x8xf32>, vector<8x16xf32>, vector<8x16xf32> -> vector<8x16xf32>
    %90 = tpu.concatenate %32, %51, %70, %89 in 1 : vector<8x16xf32>, vector<8x16xf32>, vector<8x16xf32>, vector<8x16xf32> -> vector<8x64xf32>
    %cst_31 = arith.constant dense<0.000000e+00> : vector<8x32xf32>
    %91 = tpu.matmul %90, %3, %cst_31 {dimension_numbers = #tpu.dot_dimension_numbers<[1], [0], [0], [1], [0, 0, 1, 1], [], []>} : vector<8x64xf32>, vector<64x32xf32>, vector<8x32xf32> -> vector<8x32xf32>
    %c0_32 = arith.constant 0 : index
    %c0_33 = arith.constant 0 : index
    %c0_34 = arith.constant 0 : index
    %92 = vector.load %arg5[%c0_32, %c0_33, %c0_34] : memref<1x8x32xf32, #tpu.memory_space<vmem>>, vector<1x8x32xf32>
    %93 = vector.shape_cast %92 : vector<1x8x32xf32> to vector<8x32xf32>
    %94 = vector.shape_cast %91 : vector<8x32xf32> to vector<1x8x32xf32>
    tpu.vector_store %arg5[%c0_32, %c0_33, %c0_34], %94 {strides = array<i32>} : memref<1x8x32xf32, #tpu.memory_space<vmem>>, vector<1x8x32xf32>,
    return
  }
  func.func @transform_0(%arg0: i32) -> (i32, i32, i32) {
    %c0_i32 = arith.constant 0 : i32
    %c0_i32_0 = arith.constant 0 : i32
    %c0_i32_1 = arith.constant 0 : i32
    return %arg0, %c0_i32, %c0_i32_0 : i32, i32, i32
  }
  func.func @transform_1(%arg0: i32) -> (i32, i32) {
    %c0_i32 = arith.constant 0 : i32
    %c0_i32_0 = arith.constant 0 : i32
    %c0_i32_1 = arith.constant 0 : i32
    return %c0_i32, %c0_i32_0 : i32, i32
  }
  func.func @transform_2(%arg0: i32) -> (i32, i32) {
    %c0_i32 = arith.constant 0 : i32
    %c0_i32_0 = arith.constant 0 : i32
    %c0_i32_1 = arith.constant 0 : i32
    return %c0_i32, %c0_i32_0 : i32, i32
  }
  func.func @transform_3(%arg0: i32) -> (i32, i32, i32) {
    %c0_i32 = arith.constant 0 : i32
    %c0_i32_0 = arith.constant 0 : i32
    %c0_i32_1 = arith.constant 0 : i32
    return %arg0, %c0_i32, %c0_i32_0 : i32, i32, i32
  }
  func.func @transform_4(%arg0: i32) -> (i32, i32, i32) {
    %c0_i32 = arith.constant 0 : i32
    %c0_i32_0 = arith.constant 0 : i32
    %c0_i32_1 = arith.constant 0 : i32
    return %arg0, %c0_i32, %c0_i32_0 : i32, i32, i32
  }
}

</mosaic_0001>

<llo_original>
// kernel: tpu_custom_call.1
$region0: #{tpu_custom_call.1}
  #allocation0 [shape = 'u32[]', space=smem, size = 0x4, offset = 0x4, fixed_abs, tag = 'smem constant byte address 0x4 - core index']
  #allocation1 [shape = 'u32[144,128]{1,0:T(1,128)}', space=vmem, size = 0x12000, scoped, tag = 'internal scratch']
  %s0 = inlined_call_operand.vmem [shape: f32[2,8,32], index: 0, kind: input, shape index: {}]
  %s1 = inlined_call_operand.vmem [shape: f32[32,192], index: 1, kind: input, shape index: {}]
  %s2 = inlined_call_operand.vmem [shape: f32[64,32], index: 2, kind: input, shape index: {}]
  %s3 = inlined_call_operand.vmem [shape: f32[2,8,8], index: 3, kind: input, shape index: {}]
  %s4 = inlined_call_operand.hbm [shape: f32[2,8,32], index: 4, kind: output, shape index: {}]
  %s5 = sld [smem:[#allocation0]]
  $region49: #{tpu_custom_call.1} parent=0
    _
  %s7 = ssub.s32 1, %s5
  %s8 = scalar_select 0, %s7, %s5
  $region1: #{tpu_custom_call.1} parent=0
    #allocation2 [shape = 'u8[8192]{0}', space=vmem, size = 0x2000, scoped, tag = 'output window, operand 0']
    #allocation3 [shape = 's32[2]{0}', space=sflag, size = 0x8, scoped, tag = 'scoped memory for tpu_custom_call.1']
    %9 = vsyncpa [#allocation3], 0
    %s10 = scalar_lea.sflag [#allocation3], 1
    %11 = vsyncpa %s10, 0
    loop: start=0, step=1, limit=4
    $region2: #{tpu_custom_call.1} parent=1 // loop_pre_header
      _
    $region3: #{tpu_custom_call.1} parent=1 // loop_header
      %s13 = sphi 0, %s17
      %p14 = scmp.ge.s32.totalorder %s13, 4
      %s23 = sphi 0, %s25
      %s26 = sphi 0, %s23
      %s27 = sphi 0, %s26
      %s43 = sphi 0, %s27
      %s47 = sphi 0, %s47
      %s49 = sphi 0, %s47
      %s50 = sphi 0, %s49
      %s64 = sphi 0, %s50
      %s68 = sphi 0, %s68
      %s70 = sphi 0, %s68
      %s71 = sphi 0, %s70
      %s85 = sphi 0, %s71
      %s91 = sphi 0, %s93
      %s94 = sphi 0, %s91
      %s95 = sphi 0, %s94
      %s111 = sphi 0, %s95
      %s117 = sphi 0, %s119
      %s120 = sphi 0, %s117
      %s121 = sphi 0, %s120
      %s137 = sphi 0, %s121
    $region4: #{tpu_custom_call.1} parent=1 // loop_header_branch
      %16 = sbr.rel (%p14) target = $region8
    $region5: #{tpu_custom_call.1} parent=1 // loop_body
      %s18 = ssub.s32 %s13, 1
      %s19 = ssub.s32 %s13, 2
      %s20 = sadd.s32 %s13, 1
      %s21 = ssub.s32 %s13, %s20
      %p22 = scmp.eq.s32.totalorder %s21, 0
      %s24 = sadd.s32 %s23, 1
      %s25 = scalar_select %p22, %s23, %s24
      %p28 = pneg %p22
      %p29 = scmp.eq.s32.totalorder %s13, 1
      %p30 = por %p28, %p29
      %p31 = scmp.ne.s32.totalorder %s23, %s26
      %p32 = scmp.eq.s32.totalorder %s13, 0
      %p33 = por %p31, %p32
      %p34 = scmp.ne.s32.totalorder %s23, %s26
      %p35 = scmp.eq.s32.totalorder %s18, 1
      %p36 = por %p34, %p35
      %p37 = scmp.ne.s32.totalorder %s26, %s27
      %p38 = scmp.eq.s32.totalorder %s18, 0
      %p39 = por %p37, %p38
      %p40 = scmp.ne.s32.totalorder %s26, %s27
      %p41 = scmp.eq.s32.totalorder %s19, 1
      %p42 = por %p40, %p41
      %p44 = scmp.ne.s32.totalorder %s27, %s43
      %p45 = scmp.eq.s32.totalorder %s19, 0
      %p46 = por %p44, %p45
      %s48 = sadd.s32 %s47, 1
      %p51 = scmp.eq.s32.totalorder %s13, 1
      %p52 = scmp.ne.s32.totalorder %s47, %s49
      %p53 = scmp.eq.s32.totalorder %s13, 0
      %p54 = por %p52, %p53
      %p55 = scmp.ne.s32.totalorder %s47, %s49
      %p56 = scmp.eq.s32.totalorder %s18, 1
      %p57 = por %p55, %p56
      %p58 = scmp.ne.s32.totalorder %s49, %s50
      %p59 = scmp.eq.s32.totalorder %s18, 0
      %p60 = por %p58, %p59
      %p61 = scmp.ne.s32.totalorder %s49, %s50
      %p62 = scmp.eq.s32.totalorder %s19, 1
      %p63 = por %p61, %p62
      %p65 = scmp.ne.s32.totalorder %s50, %s64
      %p66 = scmp.eq.s32.totalorder %s19, 0
      %p67 = por %p65, %p66
      %s69 = sadd.s32 %s68, 1
      %p72 = scmp.eq.s32.totalorder %s13, 1
      %p73 = scmp.ne.s32.totalorder %s68, %s70
      %p74 = scmp.eq.s32.totalorder %s13, 0
      %p75 = por %p73, %p74
      %p76 = scmp.ne.s32.totalorder %s68, %s70
      %p77 = scmp.eq.s32.totalorder %s18, 1
      %p78 = por %p76, %p77
      %p79 = scmp.ne.s32.totalorder %s70, %s71
      %p80 = scmp.eq.s32.totalorder %s18, 0
      %p81 = por %p79, %p80
      %p82 = scmp.ne.s32.totalorder %s70, %s71
      %p83 = scmp.eq.s32.totalorder %s19, 1
      %p84 = por %p82, %p83
      %p86 = scmp.ne.s32.totalorder %s71, %s85
      %p87 = scmp.eq.s32.totalorder %s19, 0
      %p88 = por %p86, %p87
      %s89 = ssub.s32 %s13, %s20
      %p90 = scmp.eq.s32.totalorder %s89, 0
      %s92 = sadd.s32 %s91, 1
      %s93 = scalar_select %p90, %s91, %s92
      %p96 = pneg %p90
      %p97 = scmp.eq.s32.totalorder %s13, 1
      %p98 = por %p96, %p97
      %p99 = scmp.ne.s32.totalorder %s91, %s94
      %p100 = scmp.eq.s32.totalorder %s13, 0
      %p101 = por %p99, %p100
      %p102 = scmp.ne.s32.totalorder %s91, %s94
      %p103 = scmp.eq.s32.totalorder %s18, 1
      %p104 = por %p102, %p103
      %p105 = scmp.ne.s32.totalorder %s94, %s95
      %p106 = scmp.eq.s32.totalorder %s18, 0
      %p107 = por %p105, %p106
      %p108 = scmp.ne.s32.totalorder %s94, %s95
      %p109 = scmp.eq.s32.totalorder %s19, 1
      %p110 = por %p108, %p109
      %p112 = scmp.ne.s32.totalorder %s95, %s111
      %p113 = scmp.eq.s32.totalorder %s19, 0
      %p114 = por %p112, %p113
      %s115 = ssub.s32 %s13, %s20
      %p116 = scmp.eq.s32.totalorder %s115, 0
      %s118 = sadd.s32 %s117, 1
      %s119 = scalar_select %p116, %s117, %s118
      %p122 = pneg %p116
      %p123 = scmp.eq.s32.totalorder %s13, 1
      %p124 = por %p122, %p123
      %p125 = scmp.ne.s32.totalorder %s117, %s120
      %p126 = scmp.eq.s32.totalorder %s13, 0
      %p127 = por %p125, %p126
      %p128 = scmp.ne.s32.totalorder %s117, %s120
      %p129 = scmp.eq.s32.totalorder %s18, 1
      %p130 = por %p128, %p129
      %p131 = scmp.ne.s32.totalorder %s120, %s121
      %p132 = scmp.eq.s32.totalorder %s18, 0
      %p133 = por %p131, %p132
      %p134 = scmp.ne.s32.totalorder %s120, %s121
      %p135 = scmp.eq.s32.totalorder %s19, 1
      %p136 = por %p134, %p135
      %p138 = scmp.ne.s32.totalorder %s121, %s137
      %p139 = scmp.eq.s32.totalorder %s19, 0
      %p140 = por %p138, %p139
      %p141 = scmp.le.s32.totalorder 1, %s13
      %p142 = scmp.lt.s32.totalorder %s13, 3
      %p143 = pnand %p141, %p142
      %p144 = pneg %p143
      // Predicated region
      $region9: #{tpu_custom_call.1} parent=5 // pred_check
        _
      $region10: #{tpu_custom_call.1} parent=5 // pred_check_branch
        %146 = sbr.rel (%p143) target = $region12
      $region11: #{tpu_custom_call.1} parent=5 // pred_region
        %s147 = ssub.s32 %s13, 1
        // Predicated region
        $region13: #{tpu_custom_call.1} parent=11 // pred_check
          %p148 = pneg %p60
        $region14: #{tpu_custom_call.1} parent=11 // pred_check_branch
          %150 = sbr.rel (%p148) target = $region16
        $region15: #{tpu_custom_call.1} parent=11 // pred_region
          _
        $region16: #{tpu_custom_call.1} parent=11 // pred_fallthru
          _
        // Predicated region
        $region17: #{tpu_custom_call.1} parent=11 // pred_check
          %p151 = pneg %p81
        $region18: #{tpu_custom_call.1} parent=11 // pred_check_branch
          %153 = sbr.rel (%p151) target = $region20
        $region19: #{tpu_custom_call.1} parent=11 // pred_region
          _
        $region20: #{tpu_custom_call.1} parent=11 // pred_fallthru
          _
      $region12: #{tpu_custom_call.1} parent=5 // pred_fallthru
        _
      %p154 = scmp.lt.s32.totalorder %s13, 2
      // Predicated region
      $region21: #{tpu_custom_call.1} parent=5 // pred_check
        %p155 = pneg %p154
      $region22: #{tpu_custom_call.1} parent=5 // pred_check_branch
        %157 = sbr.rel (%p155) target = $region24
      $region23: #{tpu_custom_call.1} parent=5 // pred_region
        // Predicated region
        $region25: #{tpu_custom_call.1} parent=23 // pred_check
          %p158 = pneg %p33
        $region26: #{tpu_custom_call.1} parent=23 // pred_check_branch
          %160 = sbr.rel (%p158) target = $region28
        $region27: #{tpu_custom_call.1} parent=23 // pred_region
          %p161 = scmp.lt.s32.totalorder %s13, 1
          %s162 = scalar_select %p161, %s13, 1
          %s163 = smul.addr %s162, 8
          %s164 = scalar_lea.vmem %s0, %s163
        $region28: #{tpu_custom_call.1} parent=23 // pred_fallthru
          _
        // Predicated region
        $region29: #{tpu_custom_call.1} parent=23 // pred_check
          %p165 = pneg %p101
        $region30: #{tpu_custom_call.1} parent=23 // pred_check_branch
          %167 = sbr.rel (%p165) target = $region32
        $region31: #{tpu_custom_call.1} parent=23 // pred_region
          %p168 = scmp.lt.s32.totalorder %s13, 1
          %s169 = scalar_select %p168, %s13, 1
          %s170 = smul.addr %s169, 8
          %s171 = scalar_lea.vmem %s3, %s170
        $region32: #{tpu_custom_call.1} parent=23 // pred_fallthru
          _
      $region24: #{tpu_custom_call.1} parent=5 // pred_fallthru
        _
      %p172 = scmp.le.s32.totalorder 1, %s13
      %p173 = scmp.lt.s32.totalorder %s13, 3
      %p174 = pnand %p172, %p173
      %p175 = pneg %p174
      // Predicated region
      $region33: #{tpu_custom_call.1} parent=5 // pred_check
        _
      $region34: #{tpu_custom_call.1} parent=5 // pred_check_branch
        %177 = sbr.rel (%p174) target = $region36
      $region35: #{tpu_custom_call.1} parent=5 // pred_region
        %s178 = ssub.s32 %s13, 1
        %p179 = scmp.lt.s32.totalorder %s18, 1
        %s180 = scalar_select %p179, %s18, 1
        %s181 = smul.addr %s180, 8
        %s182 = scalar_lea.vmem %s0, %s181
        %p183 = pneg %p39
        %p184 = pneg %p36
        %p185 = pneg %p60
        %p186 = pneg %p57
        %p187 = pneg %p81
        %p188 = pneg %p78
        %p189 = scmp.lt.s32.totalorder %s18, 1
        %s190 = scalar_select %p189, %s18, 1
        %s191 = smul.addr %s190, 8
        %s192 = scalar_lea.vmem %s3, %s191
        %p193 = pneg %p107
        %p194 = pneg %p104
        %p195 = pneg %p133
        %p196 = pneg %p130
        %s197 = sand.u32 %s120, 1
        %s198 = scalar_lea.sflag [#allocation3], %s197
        %s199 = sand.u32 %s120, 1
        %s200 = smul.addr %s199, 8
        %s201 = scalar_lea.vmem [#allocation2], %s200
        %p202 = scmp.lt.s32.totalorder %s18, 1
        %s203 = scalar_select %p202, %s18, 1
        %s204 = smul.addr %s203, 8
        %s205 = scalar_lea.vmem %s0, %s204
        %p206 = scmp.lt.s32.totalorder %s18, 1
        %s207 = scalar_select %p206, %s18, 1
        %s208 = smul.addr %s207, 8
        %s209 = scalar_lea.vmem %s3, %s208
        %v210 = vld [vmem:[%s205] sm:$0xff]
        %v211 = vld [vmem:[%s1] sm:$0xff]
        %v212 = vld [vmem:[%s1 + $0x8] sm:$0xff]
        %v213 = vld [vmem:[%s1 + $0x10] sm:$0xff]
        %v214 = vld [vmem:[%s1 + $0x18] sm:$0xff]
        %v215 = vld [vmem:[%s1 + $0x20] sm:$0xff]
        %v216 = vld [vmem:[%s1 + $0x28] sm:$0xff]
        %v217 = vld [vmem:[%s1 + $0x30] sm:$0xff]
        %v218 = vld [vmem:[%s1 + $0x38] sm:$0xff]
        %v219 = vld [vmem:[%s2] sm:$0xff]
        %v220 = vld [vmem:[%s2 + $0x8] sm:$0xff]
        %v221 = vld [vmem:[%s2 + $0x10] sm:$0xff]
        %v222 = vld [vmem:[%s2 + $0x18] sm:$0xff]
        %v223 = vld [vmem:[%s2 + $0x20] sm:$0xff]
        %v224 = vld [vmem:[%s2 + $0x28] sm:$0xff]
        %v225 = vld [vmem:[%s2 + $0x30] sm:$0xff]
        %v226 = vld [vmem:[%s2 + $0x38] sm:$0xff]
        %vm227 = vcmask 261120
        %v229 = vsel %vm227, %v210, 0
        %231 = vmatprep.subr.mxu0 %v212
        %232 = vmatpush1.msra.mxu0 %v211
        %233 = vmatprep.subr.mxu0 %v214
        %234 = vmatpush1.msra.mxu0 %v213
        %235 = vmatprep.subr.mxu0 %v216
        %236 = vmatpush1.msra.mxu0 %v215
        %237 = vmatprep.subr.mxu0 %v218
        %238 = vmatpush1.msra.mxu0 %v217
        %239 = vmatprep.subr.mxu0 0.0
        %240 = vmatpush1.msra.mxu0 0.0
        %241 = vmatprep.subr.mxu0 0.0
        %242 = vmatpush1.msra.mxu0 0.0
        %243 = vmatprep.subr.mxu0 0.0
        %244 = vmatpush1.msra.mxu0 0.0
        %245 = vmatprep.subr.mxu0 0.0
        %246 = vmatpush1.msra.mxu0 0.0
        %247 = vmatprep.subr.mxu0 0.0
        %248 = vmatpush1.msra.mxu0 0.0
        %249 = vmatprep.subr.mxu0 0.0
        %250 = vmatpush1.msra.mxu0 0.0
        %251 = vmatprep.subr.mxu0 0.0
        %252 = vmatpush1.msra.mxu0 0.0
        %253 = vmatprep.subr.mxu0 0.0
        %254 = vmatpush1.msra.mxu0 0.0
        %255 = vmatprep.subr.mxu0 0.0
        %256 = vmatpush1.msra.mxu0 0.0
        %257 = vmatprep.subr.mxu0 0.0
        %258 = vmatpush1.msra.mxu0 0.0
        %259 = vmatprep.subr.mxu0 0.0
        %260 = vmatpush1.msra.mxu0 0.0
        %261 = vmatprep.subr.mxu0 0.0
        %262 = vmatpush1.msra.mxu0 0.0
        %263 = vmatprep.subr.mxu0 0.0
        %264 = vmatpush1.msra.mxu0 0.0
        %265 = vmatprep.subr.mxu0 0.0
        %266 = vmatpush1.msra.mxu0 0.0
        %267 = vmatprep.subr.mxu0 0.0
        %268 = vmatpush1.msra.mxu0 0.0
        %269 = vmatprep.subr.mxu0 0.0
        %270 = vmatpush1.msra.mxu0 0.0
        %271 = vmatprep.subr.mxu0 0.0
        %272 = vmatpush1.msra.mxu0 0.0
        %273 = vmatprep.subr.mxu0 0.0
        %274 = vmatpush1.msra.mxu0 0.0
        %275 = vmatprep.subr.mxu0 0.0
        %276 = vmatpush1.msra.mxu0 0.0
        %277 = vmatprep.subr.mxu0 0.0
        %278 = vmatpush1.msra.mxu0 0.0
        %279 = vmatprep.subr.mxu0 0.0
        %280 = vmatpush1.msra.mxu0 0.0
        %281 = vmatprep.subr.mxu0 0.0
        %282 = vmatpush1.msra.mxu0 0.0
        %283 = vmatprep.subr.mxu0 0.0
        %284 = vmatpush1.msra.mxu0 0.0
        %285 = vmatprep.subr.mxu0 0.0
        %286 = vmatpush1.msra.mxu0 0.0
        %287 = vmatprep.subr.mxu0 0.0
        %288 = vmatpush1.msra.mxu0 0.0
        %289 = vmatprep.subr.mxu0 0.0
        %290 = vmatpush1.msra.mxu0 0.0
        %291 = vmatprep.subr.mxu0 0.0
        %292 = vmatpush1.msra.mxu0 0.0
        %293 = vmatprep.subr.mxu0 0.0
        %294 = vmatpush1.msra.mxu0 0.0
        %295 = vmatprep.mubr.f32.mxu0 0.0
        %296 = vmatmul.mubr.f32.gmra.mrb[0].mxu0 %v229
        %v297 = vpop.f32.mrb[0].mxu0
        %v298 = vadd.f32 0.0, %v297
        %v299 = vpop.f32.mrb[0].mxu0
        %v300 = vadd.f32 0.0, %v299
        %301 = vdwg.mxu0
        %v302 = vld [vmem:[%s209] sm:$0xff]
        %v303 = vsub.f32 1.0, %v302
        %v304 = vmul.f32 %v303, -1e+08
        %306 = vrot.lane.b32.xlu0 %v298, 64
        %v307 = vpop.permute.xlu0 %306
        %vm308 = vcmask 130048
        %v309 = vsel %vm308, %v298, 0
        %v311 = vsel %vm308, %v307, 0
        %313 = vmatprep.subr.mxu0 0.0
        %314 = vmatpush1.xpose.msra.mxu0 %v311
        %315 = vmatprep.subr.mxu0 0.0
        %316 = vmatpush1.xpose.msra.mxu0 0.0
        %317 = vmatprep.subr.mxu0 0.0
        %318 = vmatpush1.xpose.msra.mxu0 0.0
        %319 = vmatprep.subr.mxu0 0.0
        %320 = vmatpush1.xpose.msra.mxu0 0.0
        %321 = vmatprep.subr.mxu0 0.0
        %322 = vmatpush1.xpose.msra.mxu0 0.0
        %323 = vmatprep.subr.mxu0 0.0
        %324 = vmatpush1.xpose.msra.mxu0 0.0
        %325 = vmatprep.subr.mxu0 0.0
        %326 = vmatpush1.xpose.msra.mxu0 0.0
        %327 = vmatprep.subr.mxu0 0.0
        %328 = vmatpush1.xpose.msra.mxu0 0.0
        %329 = vmatprep.subr.mxu0 0.0
        %330 = vmatpush1.xpose.msra.mxu0 0.0
        %331 = vmatprep.subr.mxu0 0.0
        %332 = vmatpush1.xpose.msra.mxu0 0.0
        %333 = vmatprep.subr.mxu0 0.0
        %334 = vmatpush1.xpose.msra.mxu0 0.0
        %335 = vmatprep.subr.mxu0 0.0
        %336 = vmatpush1.xpose.msra.mxu0 0.0
        %337 = vmatprep.subr.mxu0 0.0
        %338 = vmatpush1.xpose.msra.mxu0 0.0
        %339 = vmatprep.subr.mxu0 0.0
        %340 = vmatpush1.xpose.msra.mxu0 0.0
        %341 = vmatprep.subr.mxu0 0.0
        %342 = vmatpush1.xpose.msra.mxu0 0.0
        %343 = vmatprep.subr.mxu0 0.0
        %344 = vmatpush1.xpose.msra.mxu0 0.0
        %345 = vmatprep.subr.mxu0 0.0
        %346 = vmatpush1.xpose.msra.mxu0 0.0
        %347 = vmatprep.subr.mxu0 0.0
        %348 = vmatpush1.xpose.msra.mxu0 0.0
        %349 = vmatprep.subr.mxu0 0.0
        %350 = vmatpush1.xpose.msra.mxu0 0.0
        %351 = vmatprep.subr.mxu0 0.0
        %352 = vmatpush1.xpose.msra.mxu0 0.0
        %353 = vmatprep.subr.mxu0 0.0
        %354 = vmatpush1.xpose.msra.mxu0 0.0
        %355 = vmatprep.subr.mxu0 0.0
        %356 = vmatpush1.xpose.msra.mxu0 0.0
        %357 = vmatprep.subr.mxu0 0.0
        %358 = vmatpush1.xpose.msra.mxu0 0.0
        %359 = vmatprep.subr.mxu0 0.0
        %360 = vmatpush1.xpose.msra.mxu0 0.0
        %361 = vmatprep.subr.mxu0 0.0
        %362 = vmatpush1.xpose.msra.mxu0 0.0
        %363 = vmatprep.subr.mxu0 0.0
        %364 = vmatpush1.xpose.msra.mxu0 0.0
        %365 = vmatprep.subr.mxu0 0.0
        %366 = vmatpush1.xpose.msra.mxu0 0.0
        %367 = vmatprep.subr.mxu0 0.0
        %368 = vmatpush1.xpose.msra.mxu0 0.0
        %369 = vmatprep.subr.mxu0 0.0
        %370 = vmatpush1.xpose.msra.mxu0 0.0
        %371 = vmatprep.subr.mxu0 0.0
        %372 = vmatpush1.xpose.msra.mxu0 0.0
        %373 = vmatprep.subr.mxu0 0.0
        %374 = vmatpush1.xpose.msra.mxu0 0.0
        %375 = vmatprep.subr.mxu0 0.0
        %376 = vmatpush1.xpose.msra.mxu0 0.0
        %377 = vmatprep.mubr.f32.mxu0 0.0
        %378 = vmatmul.mubr.f32.gmra.mrb[0].mxu0 %v309
        %v379 = vpop.f32.mrb[0].mxu0
        %v380 = vadd.f32 0.0, %v379
        %v381 = vpop.f32.mrb[0].mxu0
        %382 = vdwg.mxu0
        %v383 = vmul.f32 %v380, 0.25
        %v384 = vmul.f32 %v383, %v302
        %v385 = vadd.f32 %v384, %v304
        %vm386 = vcmask 64512
        %v387 = vsel %vm386, %v385, -inf
        %388 = vmax.xlane.f32.xlu0 %v387
        %v389 = vpop.xlane.xlu0 %388
        %v390 = vsub.f32 %v385, %v389
        %v391 = vmul.f32 %v390, 1.442695
        %v392 = vpow.pop %v391
        %v393 = vsel %vm386, %v392, 0.0
        %394 = vadd.xlane.f32.xlu0 %v393
        %v395 = vpop.xlane.xlu0 %394
        %v396 = vrcp.pop %v395
        %v397 = vmul.f32 %v392, %v396
        %v399 = vsel %vm386, %v397, 0
        %401 = vmatprep.subr.mxu0 0.0
        %402 = vmatpush1.msra.mxu0 %v300
        %403 = vmatprep.subr.mxu0 0.0
        %404 = vmatpush1.msra.mxu0 0.0
        %405 = vmatprep.subr.mxu0 0.0
        %406 = vmatpush1.msra.mxu0 0.0
        %407 = vmatprep.subr.mxu0 0.0
        %408 = vmatpush1.msra.mxu0 0.0
        %409 = vmatprep.subr.mxu0 0.0
        %410 = vmatpush1.msra.mxu0 0.0
        %411 = vmatprep.subr.mxu0 0.0
        %412 = vmatpush1.msra.mxu0 0.0
        %413 = vmatprep.subr.mxu0 0.0
        %414 = vmatpush1.msra.mxu0 0.0
        %415 = vmatprep.subr.mxu0 0.0
        %416 = vmatpush1.msra.mxu0 0.0
        %417 = vmatprep.subr.mxu0 0.0
        %418 = vmatpush1.msra.mxu0 0.0
        %419 = vmatprep.subr.mxu0 0.0
        %420 = vmatpush1.msra.mxu0 0.0
        %421 = vmatprep.subr.mxu0 0.0
        %422 = vmatpush1.msra.mxu0 0.0
        %423 = vmatprep.subr.mxu0 0.0
        %424 = vmatpush1.msra.mxu0 0.0
        %425 = vmatprep.subr.mxu0 0.0
        %426 = vmatpush1.msra.mxu0 0.0
        %427 = vmatprep.subr.mxu0 0.0
        %428 = vmatpush1.msra.mxu0 0.0
        %429 = vmatprep.subr.mxu0 0.0
        %430 = vmatpush1.msra.mxu0 0.0
        %431 = vmatprep.subr.mxu0 0.0
        %432 = vmatpush1.msra.mxu0 0.0
        %433 = vmatprep.subr.mxu0 0.0
        %434 = vmatpush1.msra.mxu0 0.0
        %435 = vmatprep.subr.mxu0 0.0
        %436 = vmatpush1.msra.mxu0 0.0
        %437 = vmatprep.subr.mxu0 0.0
        %438 = vmatpush1.msra.mxu0 0.0
        %439 = vmatprep.subr.mxu0 0.0
        %440 = vmatpush1.msra.mxu0 0.0
        %441 = vmatprep.subr.mxu0 0.0
        %442 = vmatpush1.msra.mxu0 0.0
        %443 = vmatprep.subr.mxu0 0.0
        %444 = vmatpush1.msra.mxu0 0.0
        %445 = vmatprep.subr.mxu0 0.0
        %446 = vmatpush1.msra.mxu0 0.0
        %447 = vmatprep.subr.mxu0 0.0
        %448 = vmatpush1.msra.mxu0 0.0
        %449 = vmatprep.subr.mxu0 0.0
        %450 = vmatpush1.msra.mxu0 0.0
        %451 = vmatprep.subr.mxu0 0.0
        %452 = vmatpush1.msra.mxu0 0.0
        %453 = vmatprep.subr.mxu0 0.0
        %454 = vmatpush1.msra.mxu0 0.0
        %455 = vmatprep.subr.mxu0 0.0
        %456 = vmatpush1.msra.mxu0 0.0
        %457 = vmatprep.subr.mxu0 0.0
        %458 = vmatpush1.msra.mxu0 0.0
        %459 = vmatprep.subr.mxu0 0.0
        %460 = vmatpush1.msra.mxu0 0.0
        %461 = vmatprep.subr.mxu0 0.0
        %462 = vmatpush1.msra.mxu0 0.0
        %463 = vmatprep.subr.mxu0 0.0
        %464 = vmatpush1.msra.mxu0 0.0
        %465 = vmatprep.mubr.f32.mxu0 0.0
        %466 = vmatmul.mubr.f32.gmra.mrb[0].mxu0 %v399
        %v467 = vpop.f32.mrb[0].mxu0
        %v468 = vadd.f32 0.0, %v467
        %v469 = vpop.f32.mrb[0].mxu0
        %470 = vdwg.mxu0
        %471 = vrot.lane.b32.xlu0 %v298, 112
        %v472 = vpop.permute.xlu0 %471
        %473 = vrot.lane.b32.xlu0 %v298, 48
        %v474 = vpop.permute.xlu0 %473
        %v475 = vsel %vm308, %v472, 0
        %v477 = vsel %vm308, %v474, 0
        %479 = vmatprep.subr.mxu0 0.0
        %480 = vmatpush1.xpose.msra.mxu0 %v477
        %481 = vmatprep.subr.mxu0 0.0
        %482 = vmatpush1.xpose.msra.mxu0 0.0
        %483 = vmatprep.subr.mxu0 0.0
        %484 = vmatpush1.xpose.msra.mxu0 0.0
        %485 = vmatprep.subr.mxu0 0.0
        %486 = vmatpush1.xpose.msra.mxu0 0.0
        %487 = vmatprep.subr.mxu0 0.0
        %488 = vmatpush1.xpose.msra.mxu0 0.0
        %489 = vmatprep.subr.mxu0 0.0
        %490 = vmatpush1.xpose.msra.mxu0 0.0
        %491 = vmatprep.subr.mxu0 0.0
        %492 = vmatpush1.xpose.msra.mxu0 0.0
        %493 = vmatprep.subr.mxu0 0.0
        %494 = vmatpush1.xpose.msra.mxu0 0.0
        %495 = vmatprep.subr.mxu0 0.0
        %496 = vmatpush1.xpose.msra.mxu0 0.0
        %497 = vmatprep.subr.mxu0 0.0
        %498 = vmatpush1.xpose.msra.mxu0 0.0
        %499 = vmatprep.subr.mxu0 0.0
        %500 = vmatpush1.xpose.msra.mxu0 0.0
        %501 = vmatprep.subr.mxu0 0.0
        %502 = vmatpush1.xpose.msra.mxu0 0.0
        %503 = vmatprep.subr.mxu0 0.0
        %504 = vmatpush1.xpose.msra.mxu0 0.0
        %505 = vmatprep.subr.mxu0 0.0
        %506 = vmatpush1.xpose.msra.mxu0 0.0
        %507 = vmatprep.subr.mxu0 0.0
        %508 = vmatpush1.xpose.msra.mxu0 0.0
        %509 = vmatprep.subr.mxu0 0.0
        %510 = vmatpush1.xpose.msra.mxu0 0.0
        %511 = vmatprep.subr.mxu0 0.0
        %512 = vmatpush1.xpose.msra.mxu0 0.0
        %513 = vmatprep.subr.mxu0 0.0
        %514 = vmatpush1.xpose.msra.mxu0 0.0
        %515 = vmatprep.subr.mxu0 0.0
        %516 = vmatpush1.xpose.msra.mxu0 0.0
        %517 = vmatprep.subr.mxu0 0.0
        %518 = vmatpush1.xpose.msra.mxu0 0.0
        %519 = vmatprep.subr.mxu0 0.0
        %520 = vmatpush1.xpose.msra.mxu0 0.0
        %521 = vmatprep.subr.mxu0 0.0
        %522 = vmatpush1.xpose.msra.mxu0 0.0
        %523 = vmatprep.subr.mxu0 0.0
        %524 = vmatpush1.xpose.msra.mxu0 0.0
        %525 = vmatprep.subr.mxu0 0.0
        %526 = vmatpush1.xpose.msra.mxu0 0.0
        %527 = vmatprep.subr.mxu0 0.0
        %528 = vmatpush1.xpose.msra.mxu0 0.0
        %529 = vmatprep.subr.mxu0 0.0
        %530 = vmatpush1.xpose.msra.mxu0 0.0
        %531 = vmatprep.subr.mxu0 0.0
        %532 = vmatpush1.xpose.msra.mxu0 0.0
        %533 = vmatprep.subr.mxu0 0.0
        %534 = vmatpush1.xpose.msra.mxu0 0.0
        %535 = vmatprep.subr.mxu0 0.0
        %536 = vmatpush1.xpose.msra.mxu0 0.0
        %537 = vmatprep.subr.mxu0 0.0
        %538 = vmatpush1.xpose.msra.mxu0 0.0
        %539 = vmatprep.subr.mxu0 0.0
        %540 = vmatpush1.xpose.msra.mxu0 0.0
        %541 = vmatprep.subr.mxu0 0.0
        %542 = vmatpush1.xpose.msra.mxu0 0.0
        %543 = vmatprep.mubr.f32.mxu0 0.0
        %544 = vmatmul.mubr.f32.gmra.mrb[0].mxu0 %v475
        %v545 = vpop.f32.mrb[0].mxu0
        %v546 = vadd.f32 0.0, %v545
        %v547 = vpop.f32.mrb[0].mxu0
        %548 = vdwg.mxu0
        %v549 = vmul.f32 %v546, 0.25
        %v550 = vmul.f32 %v549, %v302
        %v551 = vadd.f32 %v550, %v304
        %v552 = vsel %vm386, %v551, -inf
        %553 = vmax.xlane.f32.xlu0 %v552
        %v554 = vpop.xlane.xlu0 %553
        %v555 = vsub.f32 %v551, %v554
        %v556 = vmul.f32 %v555, 1.442695
        %v557 = vpow.pop %v556
        %v558 = vsel %vm386, %v557, 0.0
        %559 = vadd.xlane.f32.xlu0 %v558
        %v560 = vpop.xlane.xlu0 %559
        %v561 = vrcp.pop %v560
        %v562 = vmul.f32 %v557, %v561
        %564 = vrot.lane.b32.xlu0 %v300, 112
        %v565 = vpop.permute.xlu0 %564
        %v568 = vsel %vm386, %v562, 0
        %570 = vmatprep.subr.mxu0 0.0
        %571 = vmatpush1.msra.mxu0 %v565
        %572 = vmatprep.subr.mxu0 0.0
        %573 = vmatpush1.msra.mxu0 0.0
        %574 = vmatprep.subr.mxu0 0.0
        %575 = vmatpush1.msra.mxu0 0.0
        %576 = vmatprep.subr.mxu0 0.0
        %577 = vmatpush1.msra.mxu0 0.0
        %578 = vmatprep.subr.mxu0 0.0
        %579 = vmatpush1.msra.mxu0 0.0
        %580 = vmatprep.subr.mxu0 0.0
        %581 = vmatpush1.msra.mxu0 0.0
        %582 = vmatprep.subr.mxu0 0.0
        %583 = vmatpush1.msra.mxu0 0.0
        %584 = vmatprep.subr.mxu0 0.0
        %585 = vmatpush1.msra.mxu0 0.0
        %586 = vmatprep.subr.mxu0 0.0
        %587 = vmatpush1.msra.mxu0 0.0
        %588 = vmatprep.subr.mxu0 0.0
        %589 = vmatpush1.msra.mxu0 0.0
        %590 = vmatprep.subr.mxu0 0.0
        %591 = vmatpush1.msra.mxu0 0.0
        %592 = vmatprep.subr.mxu0 0.0
        %593 = vmatpush1.msra.mxu0 0.0
        %594 = vmatprep.subr.mxu0 0.0
        %595 = vmatpush1.msra.mxu0 0.0
        %596 = vmatprep.subr.mxu0 0.0
        %597 = vmatpush1.msra.mxu0 0.0
        %598 = vmatprep.subr.mxu0 0.0
        %599 = vmatpush1.msra.mxu0 0.0
        %600 = vmatprep.subr.mxu0 0.0
        %601 = vmatpush1.msra.mxu0 0.0
        %602 = vmatprep.subr.mxu0 0.0
        %603 = vmatpush1.msra.mxu0 0.0
        %604 = vmatprep.subr.mxu0 0.0
        %605 = vmatpush1.msra.mxu0 0.0
        %606 = vmatprep.subr.mxu0 0.0
        %607 = vmatpush1.msra.mxu0 0.0
        %608 = vmatprep.subr.mxu0 0.0
        %609 = vmatpush1.msra.mxu0 0.0
        %610 = vmatprep.subr.mxu0 0.0
        %611 = vmatpush1.msra.mxu0 0.0
        %612 = vmatprep.subr.mxu0 0.0
        %613 = vmatpush1.msra.mxu0 0.0
        %614 = vmatprep.subr.mxu0 0.0
        %615 = vmatpush1.msra.mxu0 0.0
        %616 = vmatprep.subr.mxu0 0.0
        %617 = vmatpush1.msra.mxu0 0.0
        %618 = vmatprep.subr.mxu0 0.0
        %619 = vmatpush1.msra.mxu0 0.0
        %620 = vmatprep.subr.mxu0 0.0
        %621 = vmatpush1.msra.mxu0 0.0
        %622 = vmatprep.subr.mxu0 0.0
        %623 = vmatpush1.msra.mxu0 0.0
        %624 = vmatprep.subr.mxu0 0.0
        %625 = vmatpush1.msra.mxu0 0.0
        %626 = vmatprep.subr.mxu0 0.0
        %627 = vmatpush1.msra.mxu0 0.0
        %628 = vmatprep.subr.mxu0 0.0
        %629 = vmatpush1.msra.mxu0 0.0
        %630 = vmatprep.subr.mxu0 0.0
        %631 = vmatpush1.msra.mxu0 0.0
        %632 = vmatprep.subr.mxu0 0.0
        %633 = vmatpush1.msra.mxu0 0.0
        %634 = vmatprep.mubr.f32.mxu0 0.0
        %635 = vmatmul.mubr.f32.gmra.mrb[0].mxu0 %v568
        %v636 = vpop.f32.mrb[0].mxu0
        %v637 = vadd.f32 0.0, %v636
        %v638 = vpop.f32.mrb[0].mxu0
        %639 = vdwg.mxu0
        %640 = vrot.lane.b32.xlu0 %v298, 96
        %v641 = vpop.permute.xlu0 %640
        %642 = vrot.lane.b32.xlu0 %v298, 32
        %v643 = vpop.permute.xlu0 %642
        %v644 = vsel %vm308, %v641, 0
        %v646 = vsel %vm308, %v643, 0
        %648 = vmatprep.subr.mxu0 0.0
        %649 = vmatpush1.xpose.msra.mxu0 %v646
        %650 = vmatprep.subr.mxu0 0.0
        %651 = vmatpush1.xpose.msra.mxu0 0.0
        %652 = vmatprep.subr.mxu0 0.0
        %653 = vmatpush1.xpose.msra.mxu0 0.0
        %654 = vmatprep.subr.mxu0 0.0
        %655 = vmatpush1.xpose.msra.mxu0 0.0
        %656 = vmatprep.subr.mxu0 0.0
        %657 = vmatpush1.xpose.msra.mxu0 0.0
        %658 = vmatprep.subr.mxu0 0.0
        %659 = vmatpush1.xpose.msra.mxu0 0.0
        %660 = vmatprep.subr.mxu0 0.0
        %661 = vmatpush1.xpose.msra.mxu0 0.0
        %662 = vmatprep.subr.mxu0 0.0
        %663 = vmatpush1.xpose.msra.mxu0 0.0
        %664 = vmatprep.subr.mxu0 0.0
        %665 = vmatpush1.xpose.msra.mxu0 0.0
        %666 = vmatprep.subr.mxu0 0.0
        %667 = vmatpush1.xpose.msra.mxu0 0.0
        %668 = vmatprep.subr.mxu0 0.0
        %669 = vmatpush1.xpose.msra.mxu0 0.0
        %670 = vmatprep.subr.mxu0 0.0
        %671 = vmatpush1.xpose.msra.mxu0 0.0
        %672 = vmatprep.subr.mxu0 0.0
        %673 = vmatpush1.xpose.msra.mxu0 0.0
        %674 = vmatprep.subr.mxu0 0.0
        %675 = vmatpush1.xpose.msra.mxu0 0.0
        %676 = vmatprep.subr.mxu0 0.0
        %677 = vmatpush1.xpose.msra.mxu0 0.0
        %678 = vmatprep.subr.mxu0 0.0
        %679 = vmatpush1.xpose.msra.mxu0 0.0
        %680 = vmatprep.subr.mxu0 0.0
        %681 = vmatpush1.xpose.msra.mxu0 0.0
        %682 = vmatprep.subr.mxu0 0.0
        %683 = vmatpush1.xpose.msra.mxu0 0.0
        %684 = vmatprep.subr.mxu0 0.0
        %685 = vmatpush1.xpose.msra.mxu0 0.0
        %686 = vmatprep.subr.mxu0 0.0
        %687 = vmatpush1.xpose.msra.mxu0 0.0
        %688 = vmatprep.subr.mxu0 0.0
        %689 = vmatpush1.xpose.msra.mxu0 0.0
        %690 = vmatprep.subr.mxu0 0.0
        %691 = vmatpush1.xpose.msra.mxu0 0.0
        %692 = vmatprep.subr.mxu0 0.0
        %693 = vmatpush1.xpose.msra.mxu0 0.0
        %694 = vmatprep.subr.mxu0 0.0
        %695 = vmatpush1.xpose.msra.mxu0 0.0
        %696 = vmatprep.subr.mxu0 0.0
        %697 = vmatpush1.xpose.msra.mxu0 0.0
        %698 = vmatprep.subr.mxu0 0.0
        %699 = vmatpush1.xpose.msra.mxu0 0.0
        %700 = vmatprep.subr.mxu0 0.0
        %701 = vmatpush1.xpose.msra.mxu0 0.0
        %702 = vmatprep.subr.mxu0 0.0
        %703 = vmatpush1.xpose.msra.mxu0 0.0
        %704 = vmatprep.subr.mxu0 0.0
        %705 = vmatpush1.xpose.msra.mxu0 0.0
        %706 = vmatprep.subr.mxu0 0.0
        %707 = vmatpush1.xpose.msra.mxu0 0.0
        %708 = vmatprep.subr.mxu0 0.0
        %709 = vmatpush1.xpose.msra.mxu0 0.0
        %710 = vmatprep.subr.mxu0 0.0
        %711 = vmatpush1.xpose.msra.mxu0 0.0
        %712 = vmatprep.mubr.f32.mxu0 0.0
        %713 = vmatmul.mubr.f32.gmra.mrb[0].mxu0 %v644
        %v714 = vpop.f32.mrb[0].mxu0
        %v715 = vadd.f32 0.0, %v714
        %v716 = vpop.f32.mrb[0].mxu0
        %717 = vdwg.mxu0
        %v718 = vmul.f32 %v715, 0.25
        %v719 = vmul.f32 %v718, %v302
        %v720 = vadd.f32 %v719, %v304
        %v721 = vsel %vm386, %v720, -inf
        %722 = vmax.xlane.f32.xlu0 %v721
        %v723 = vpop.xlane.xlu0 %722
        %v724 = vsub.f32 %v720, %v723
        %v725 = vmul.f32 %v724, 1.442695
        %v726 = vpow.pop %v725
        %v727 = vsel %vm386, %v726, 0.0
        %728 = vadd.xlane.f32.xlu0 %v727
        %v729 = vpop.xlane.xlu0 %728
        %v730 = vrcp.pop %v729
        %v731 = vmul.f32 %v726, %v730
        %732 = vrot.lane.b32.xlu0 %v300, 96
        %v733 = vpop.permute.xlu0 %732
        %v736 = vsel %vm386, %v731, 0
        %738 = vmatprep.subr.mxu0 0.0
        %739 = vmatpush1.msra.mxu0 %v733
        %740 = vmatprep.subr.mxu0 0.0
        %741 = vmatpush1.msra.mxu0 0.0
        %742 = vmatprep.subr.mxu0 0.0
        %743 = vmatpush1.msra.mxu0 0.0
        %744 = vmatprep.subr.mxu0 0.0
        %745 = vmatpush1.msra.mxu0 0.0
        %746 = vmatprep.subr.mxu0 0.0
        %747 = vmatpush1.msra.mxu0 0.0
        %748 = vmatprep.subr.mxu0 0.0
        %749 = vmatpush1.msra.mxu0 0.0
        %750 = vmatprep.subr.mxu0 0.0
        %751 = vmatpush1.msra.mxu0 0.0
        %752 = vmatprep.subr.mxu0 0.0
        %753 = vmatpush1.msra.mxu0 0.0
        %754 = vmatprep.subr.mxu0 0.0
        %755 = vmatpush1.msra.mxu0 0.0
        %756 = vmatprep.subr.mxu0 0.0
        %757 = vmatpush1.msra.mxu0 0.0
        %758 = vmatprep.subr.mxu0 0.0
        %759 = vmatpush1.msra.mxu0 0.0
        %760 = vmatprep.subr.mxu0 0.0
        %761 = vmatpush1.msra.mxu0 0.0
        %762 = vmatprep.subr.mxu0 0.0
        %763 = vmatpush1.msra.mxu0 0.0
        %764 = vmatprep.subr.mxu0 0.0
        %765 = vmatpush1.msra.mxu0 0.0
        %766 = vmatprep.subr.mxu0 0.0
        %767 = vmatpush1.msra.mxu0 0.0
        %768 = vmatprep.subr.mxu0 0.0
        %769 = vmatpush1.msra.mxu0 0.0
        %770 = vmatprep.subr.mxu0 0.0
        %771 = vmatpush1.msra.mxu0 0.0
        %772 = vmatprep.subr.mxu0 0.0
        %773 = vmatpush1.msra.mxu0 0.0
        %774 = vmatprep.subr.mxu0 0.0
        %775 = vmatpush1.msra.mxu0 0.0
        %776 = vmatprep.subr.mxu0 0.0
        %777 = vmatpush1.msra.mxu0 0.0
        %778 = vmatprep.subr.mxu0 0.0
        %779 = vmatpush1.msra.mxu0 0.0
        %780 = vmatprep.subr.mxu0 0.0
        %781 = vmatpush1.msra.mxu0 0.0
        %782 = vmatprep.subr.mxu0 0.0
        %783 = vmatpush1.msra.mxu0 0.0
        %784 = vmatprep.subr.mxu0 0.0
        %785 = vmatpush1.msra.mxu0 0.0
        %786 = vmatprep.subr.mxu0 0.0
        %787 = vmatpush1.msra.mxu0 0.0
        %788 = vmatprep.subr.mxu0 0.0
        %789 = vmatpush1.msra.mxu0 0.0
        %790 = vmatprep.subr.mxu0 0.0
        %791 = vmatpush1.msra.mxu0 0.0
        %792 = vmatprep.subr.mxu0 0.0
        %793 = vmatpush1.msra.mxu0 0.0
        %794 = vmatprep.subr.mxu0 0.0
        %795 = vmatpush1.msra.mxu0 0.0
        %796 = vmatprep.subr.mxu0 0.0
        %797 = vmatpush1.msra.mxu0 0.0
        %798 = vmatprep.subr.mxu0 0.0
        %799 = vmatpush1.msra.mxu0 0.0
        %800 = vmatprep.subr.mxu0 0.0
        %801 = vmatpush1.msra.mxu0 0.0
        %802 = vmatprep.mubr.f32.mxu0 0.0
        %803 = vmatmul.mubr.f32.gmra.mrb[0].mxu0 %v736
        %v804 = vpop.f32.mrb[0].mxu0
        %v805 = vadd.f32 0.0, %v804
        %v806 = vpop.f32.mrb[0].mxu0
        %807 = vdwg.mxu0
        %808 = vrot.lane.b32.xlu0 %v298, 80
        %v809 = vpop.permute.xlu0 %808
        %810 = vrot.lane.b32.xlu0 %v298, 16
        %v811 = vpop.permute.xlu0 %810
        %v812 = vsel %vm308, %v809, 0
        %v814 = vsel %vm308, %v811, 0
        %816 = vmatprep.subr.mxu0 0.0
        %817 = vmatpush1.xpose.msra.mxu0 %v814
        %818 = vmatprep.subr.mxu0 0.0
        %819 = vmatpush1.xpose.msra.mxu0 0.0
        %820 = vmatprep.subr.mxu0 0.0
        %821 = vmatpush1.xpose.msra.mxu0 0.0
        %822 = vmatprep.subr.mxu0 0.0
        %823 = vmatpush1.xpose.msra.mxu0 0.0
        %824 = vmatprep.subr.mxu0 0.0
        %825 = vmatpush1.xpose.msra.mxu0 0.0
        %826 = vmatprep.subr.mxu0 0.0
        %827 = vmatpush1.xpose.msra.mxu0 0.0
        %828 = vmatprep.subr.mxu0 0.0
        %829 = vmatpush1.xpose.msra.mxu0 0.0
        %830 = vmatprep.subr.mxu0 0.0
        %831 = vmatpush1.xpose.msra.mxu0 0.0
        %832 = vmatprep.subr.mxu0 0.0
        %833 = vmatpush1.xpose.msra.mxu0 0.0
        %834 = vmatprep.subr.mxu0 0.0
        %835 = vmatpush1.xpose.msra.mxu0 0.0
        %836 = vmatprep.subr.mxu0 0.0
        %837 = vmatpush1.xpose.msra.mxu0 0.0
        %838 = vmatprep.subr.mxu0 0.0
        %839 = vmatpush1.xpose.msra.mxu0 0.0
        %840 = vmatprep.subr.mxu0 0.0
        %841 = vmatpush1.xpose.msra.mxu0 0.0
        %842 = vmatprep.subr.mxu0 0.0
        %843 = vmatpush1.xpose.msra.mxu0 0.0
        %844 = vmatprep.subr.mxu0 0.0
        %845 = vmatpush1.xpose.msra.mxu0 0.0
        %846 = vmatprep.subr.mxu0 0.0
        %847 = vmatpush1.xpose.msra.mxu0 0.0
        %848 = vmatprep.subr.mxu0 0.0
        %849 = vmatpush1.xpose.msra.mxu0 0.0
        %850 = vmatprep.subr.mxu0 0.0
        %851 = vmatpush1.xpose.msra.mxu0 0.0
        %852 = vmatprep.subr.mxu0 0.0
        %853 = vmatpush1.xpose.msra.mxu0 0.0
        %854 = vmatprep.subr.mxu0 0.0
        %855 = vmatpush1.xpose.msra.mxu0 0.0
        %856 = vmatprep.subr.mxu0 0.0
        %857 = vmatpush1.xpose.msra.mxu0 0.0
        %858 = vmatprep.subr.mxu0 0.0
        %859 = vmatpush1.xpose.msra.mxu0 0.0
        %860 = vmatprep.subr.mxu0 0.0
        %861 = vmatpush1.xpose.msra.mxu0 0.0
        %862 = vmatprep.subr.mxu0 0.0
        %863 = vmatpush1.xpose.msra.mxu0 0.0
        %864 = vmatprep.subr.mxu0 0.0
        %865 = vmatpush1.xpose.msra.mxu0 0.0
        %866 = vmatprep.subr.mxu0 0.0
        %867 = vmatpush1.xpose.msra.mxu0 0.0
        %868 = vmatprep.subr.mxu0 0.0
        %869 = vmatpush1.xpose.msra.mxu0 0.0
        %870 = vmatprep.subr.mxu0 0.0
        %871 = vmatpush1.xpose.msra.mxu0 0.0
        %872 = vmatprep.subr.mxu0 0.0
        %873 = vmatpush1.xpose.msra.mxu0 0.0
        %874 = vmatprep.subr.mxu0 0.0
        %875 = vmatpush1.xpose.msra.mxu0 0.0
        %876 = vmatprep.subr.mxu0 0.0
        %877 = vmatpush1.xpose.msra.mxu0 0.0
        %878 = vmatprep.subr.mxu0 0.0
        %879 = vmatpush1.xpose.msra.mxu0 0.0
        %880 = vmatprep.mubr.f32.mxu0 0.0
        %881 = vmatmul.mubr.f32.gmra.mrb[0].mxu0 %v812
        %v882 = vpop.f32.mrb[0].mxu0
        %v883 = vadd.f32 0.0, %v882
        %v884 = vpop.f32.mrb[0].mxu0
        %885 = vdwg.mxu0
        %v886 = vmul.f32 %v883, 0.25
        %v887 = vmul.f32 %v886, %v302
        %v888 = vadd.f32 %v887, %v304
        %v889 = vsel %vm386, %v888, -inf
        %890 = vmax.xlane.f32.xlu0 %v889
        %v891 = vpop.xlane.xlu0 %890
        %v892 = vsub.f32 %v888, %v891
        %v893 = vmul.f32 %v892, 1.442695
        %v894 = vpow.pop %v893
        %v895 = vsel %vm386, %v894, 0.0
        %896 = vadd.xlane.f32.xlu0 %v895
        %v897 = vpop.xlane.xlu0 %896
        %v898 = vrcp.pop %v897
        %v899 = vmul.f32 %v894, %v898
        %900 = vrot.lane.b32.xlu0 %v300, 80
        %v901 = vpop.permute.xlu0 %900
        %v904 = vsel %vm386, %v899, 0
        %906 = vmatprep.subr.mxu0 0.0
        %907 = vmatpush1.msra.mxu0 %v901
        %908 = vmatprep.subr.mxu0 0.0
        %909 = vmatpush1.msra.mxu0 0.0
        %910 = vmatprep.subr.mxu0 0.0
        %911 = vmatpush1.msra.mxu0 0.0
        %912 = vmatprep.subr.mxu0 0.0
        %913 = vmatpush1.msra.mxu0 0.0
        %914 = vmatprep.subr.mxu0 0.0
        %915 = vmatpush1.msra.mxu0 0.0
        %916 = vmatprep.subr.mxu0 0.0
        %917 = vmatpush1.msra.mxu0 0.0
        %918 = vmatprep.subr.mxu0 0.0
        %919 = vmatpush1.msra.mxu0 0.0
        %920 = vmatprep.subr.mxu0 0.0
        %921 = vmatpush1.msra.mxu0 0.0
        %922 = vmatprep.subr.mxu0 0.0
        %923 = vmatpush1.msra.mxu0 0.0
        %924 = vmatprep.subr.mxu0 0.0
        %925 = vmatpush1.msra.mxu0 0.0
        %926 = vmatprep.subr.mxu0 0.0
        %927 = vmatpush1.msra.mxu0 0.0
        %928 = vmatprep.subr.mxu0 0.0
        %929 = vmatpush1.msra.mxu0 0.0
        %930 = vmatprep.subr.mxu0 0.0
        %931 = vmatpush1.msra.mxu0 0.0
        %932 = vmatprep.subr.mxu0 0.0
        %933 = vmatpush1.msra.mxu0 0.0
        %934 = vmatprep.subr.mxu0 0.0
        %935 = vmatpush1.msra.mxu0 0.0
        %936 = vmatprep.subr.mxu0 0.0
        %937 = vmatpush1.msra.mxu0 0.0
        %938 = vmatprep.subr.mxu0 0.0
        %939 = vmatpush1.msra.mxu0 0.0
        %940 = vmatprep.subr.mxu0 0.0
        %941 = vmatpush1.msra.mxu0 0.0
        %942 = vmatprep.subr.mxu0 0.0
        %943 = vmatpush1.msra.mxu0 0.0
        %944 = vmatprep.subr.mxu0 0.0
        %945 = vmatpush1.msra.mxu0 0.0
        %946 = vmatprep.subr.mxu0 0.0
        %947 = vmatpush1.msra.mxu0 0.0
        %948 = vmatprep.subr.mxu0 0.0
        %949 = vmatpush1.msra.mxu0 0.0
        %950 = vmatprep.subr.mxu0 0.0
        %951 = vmatpush1.msra.mxu0 0.0
        %952 = vmatprep.subr.mxu0 0.0
        %953 = vmatpush1.msra.mxu0 0.0
        %954 = vmatprep.subr.mxu0 0.0
        %955 = vmatpush1.msra.mxu0 0.0
        %956 = vmatprep.subr.mxu0 0.0
        %957 = vmatpush1.msra.mxu0 0.0
        %958 = vmatprep.subr.mxu0 0.0
        %959 = vmatpush1.msra.mxu0 0.0
        %960 = vmatprep.subr.mxu0 0.0
        %961 = vmatpush1.msra.mxu0 0.0
        %962 = vmatprep.subr.mxu0 0.0
        %963 = vmatpush1.msra.mxu0 0.0
        %964 = vmatprep.subr.mxu0 0.0
        %965 = vmatpush1.msra.mxu0 0.0
        %966 = vmatprep.subr.mxu0 0.0
        %967 = vmatpush1.msra.mxu0 0.0
        %968 = vmatprep.subr.mxu0 0.0
        %969 = vmatpush1.msra.mxu0 0.0
        %970 = vmatprep.mubr.f32.mxu0 0.0
        %971 = vmatmul.mubr.f32.gmra.mrb[0].mxu0 %v904
        %v972 = vpop.f32.mrb[0].mxu0
        %v973 = vadd.f32 0.0, %v972
        %v974 = vpop.f32.mrb[0].mxu0
        %975 = vdwg.mxu0
        %977 = vrot.lane.b32.xlu0 %v637, 16
        %v978 = vpop.permute.xlu0 %977
        %981 = vrot.lane.b32.xlu0 %v805, 32
        %v982 = vpop.permute.xlu0 %981
        %985 = vrot.lane.b32.xlu0 %v973, 48
        %v986 = vpop.permute.xlu0 %985
        %v988 = vsel %vm308, %v468, %v978
        %v989 = vsel %vm227, %v988, %v982
        %vm990 = vcmask 392192
        %v991 = vsel %vm990, %v989, %v986
        %vm992 = vcmask 523264
        %v994 = vsel %vm992, %v991, 0
        %996 = vmatprep.subr.mxu0 0.0
        %997 = vmatpush1.msra.mxu0 %v219
        %998 = vmatprep.subr.mxu0 0.0
        %999 = vmatpush1.msra.mxu0 %v220
        %1000 = vmatprep.subr.mxu0 0.0
        %1001 = vmatpush1.msra.mxu0 %v221
        %1002 = vmatprep.subr.mxu0 0.0
        %1003 = vmatpush1.msra.mxu0 %v222
        %1004 = vmatprep.subr.mxu0 0.0
        %1005 = vmatpush1.msra.mxu0 %v223
        %1006 = vmatprep.subr.mxu0 0.0
        %1007 = vmatpush1.msra.mxu0 %v224
        %1008 = vmatprep.subr.mxu0 0.0
        %1009 = vmatpush1.msra.mxu0 %v225
        %1010 = vmatprep.subr.mxu0 0.0
        %1011 = vmatpush1.msra.mxu0 %v226
        %1012 = vmatprep.subr.mxu0 0.0
        %1013 = vmatpush1.msra.mxu0 0.0
        %1014 = vmatprep.subr.mxu0 0.0
        %1015 = vmatpush1.msra.mxu0 0.0
        %1016 = vmatprep.subr.mxu0 0.0
        %1017 = vmatpush1.msra.mxu0 0.0
        %1018 = vmatprep.subr.mxu0 0.0
        %1019 = vmatpush1.msra.mxu0 0.0
        %1020 = vmatprep.subr.mxu0 0.0
        %1021 = vmatpush1.msra.mxu0 0.0
        %1022 = vmatprep.subr.mxu0 0.0
        %1023 = vmatpush1.msra.mxu0 0.0
        %1024 = vmatprep.subr.mxu0 0.0
        %1025 = vmatpush1.msra.mxu0 0.0
        %1026 = vmatprep.subr.mxu0 0.0
        %1027 = vmatpush1.msra.mxu0 0.0
        %1028 = vmatprep.subr.mxu0 0.0
        %1029 = vmatpush1.msra.mxu0 0.0
        %1030 = vmatprep.subr.mxu0 0.0
        %1031 = vmatpush1.msra.mxu0 0.0
        %1032 = vmatprep.subr.mxu0 0.0
        %1033 = vmatpush1.msra.mxu0 0.0
        %1034 = vmatprep.subr.mxu0 0.0
        %1035 = vmatpush1.msra.mxu0 0.0
        %1036 = vmatprep.subr.mxu0 0.0
        %1037 = vmatpush1.msra.mxu0 0.0
        %1038 = vmatprep.subr.mxu0 0.0
        %1039 = vmatpush1.msra.mxu0 0.0
        %1040 = vmatprep.subr.mxu0 0.0
        %1041 = vmatpush1.msra.mxu0 0.0
        %1042 = vmatprep.subr.mxu0 0.0
        %1043 = vmatpush1.msra.mxu0 0.0
        %1044 = vmatprep.subr.mxu0 0.0
        %1045 = vmatpush1.msra.mxu0 0.0
        %1046 = vmatprep.subr.mxu0 0.0
        %1047 = vmatpush1.msra.mxu0 0.0
        %1048 = vmatprep.subr.mxu0 0.0
        %1049 = vmatpush1.msra.mxu0 0.0
        %1050 = vmatprep.subr.mxu0 0.0
        %1051 = vmatpush1.msra.mxu0 0.0
        %1052 = vmatprep.subr.mxu0 0.0
        %1053 = vmatpush1.msra.mxu0 0.0
        %1054 = vmatprep.subr.mxu0 0.0
        %1055 = vmatpush1.msra.mxu0 0.0
        %1056 = vmatprep.subr.mxu0 0.0
        %1057 = vmatpush1.msra.mxu0 0.0
        %1058 = vmatprep.subr.mxu0 0.0
        %1059 = vmatpush1.msra.mxu0 0.0
        %1060 = vmatprep.mubr.f32.mxu0 0.0
        %1061 = vmatmul.mubr.f32.gmra.mrb[0].mxu0 %v994
        %v1062 = vpop.f32.mrb[0].mxu0
        %v1063 = vadd.f32 0.0, %v1062
        %v1064 = vpop.f32.mrb[0].mxu0
        %1065 = vdwg.mxu0
        %1066 = vst.msk [vmem:[%s201] sm:$0xff] %vm227, %v1063
        %s1067 = sand.u32 %s120, 1
        %s1068 = scalar_lea.sflag [#allocation3], %s1067
        %s1069 = sand.u32 %s120, 1
        %s1070 = smul.addr %s1069, 8
        %s1071 = scalar_lea.vmem [#allocation2], %s1070
        // Predicated region
        $region37: #{tpu_custom_call.1} parent=35 // pred_check
          %p1072 = pneg %p130
        $region38: #{tpu_custom_call.1} parent=35 // pred_check_branch
          %1074 = sbr.rel (%p1072) target = $region40
        $region39: #{tpu_custom_call.1} parent=35 // pred_region
          %s1076 = ssub.s32 128, 128
          %1077 = vsyncadd %s1068, %s1076
          %s1078 = smul.addr %s18, 128
          %s1079 = scalar_lea.hbm %s4, %s1078
          %s1081 = sshll.u32 %s1071, 4
          %s1082 = int_to_ptr.vmem [resolvable:$true] %s1081
          %1084 = dma.vmem_to_hbm [thread:$0]  %s1082, 128, %s1079, %s1068
        $region40: #{tpu_custom_call.1} parent=35 // pred_fallthru
          _
      $region36: #{tpu_custom_call.1} parent=5 // pred_fallthru
        _
      %p1085 = scmp.le.s32.totalorder 2, %s13
      // Predicated region
      $region41: #{tpu_custom_call.1} parent=5 // pred_check
        %p1086 = pneg %p1085
      $region42: #{tpu_custom_call.1} parent=5 // pred_check_branch
        %1088 = sbr.rel (%p1086) target = $region44
      $region43: #{tpu_custom_call.1} parent=5 // pred_region
        %s1089 = ssub.s32 %s13, 2
        // Predicated region
        $region45: #{tpu_custom_call.1} parent=43 // pred_check
          %p1090 = pneg %p136
        $region46: #{tpu_custom_call.1} parent=43 // pred_check_branch
          %1092 = sbr.rel (%p1090) target = $region48
        $region47: #{tpu_custom_call.1} parent=43 // pred_region
          %s1093 = sand.u32 %s121, 1
          %s1094 = scalar_lea.sflag [#allocation3], %s1093
          %s1095 = sand.u32 %s121, 1
          %s1096 = smul.addr %s1095, 8
          %s1097 = scalar_lea.vmem [#allocation2], %s1096
          %1098 = dma.done %s1094, 128
        $region48: #{tpu_custom_call.1} parent=43 // pred_fallthru
          _
      $region44: #{tpu_custom_call.1} parent=5 // pred_fallthru
        _
    $region6: #{tpu_custom_call.1} parent=1 // loop_footer
      %s17 = sadd.s32 1, %s13
    $region7: #{tpu_custom_call.1} parent=1 // loop_footer_branch
      %12 = sbr.rel target = $region3
    $region8: #{tpu_custom_call.1} parent=1 // loop_exit
      _
    %1099 = vsyncpa [#allocation3], 1
    %s1100 = scalar_lea.sflag [#allocation3], 1
    %1101 = vsyncpa %s1100, 1

</llo_original>
